<compile_context>
chip_gen: v7x
topology: tpu7x:2x2x1
jax: 0.10.0
libtpu: 0.0.40
codegen_flags: <defaults>
</compile_context>

<pallas_src>
import jax
import jax.numpy as jnp
from jax.experimental import pallas as pl
from jax.experimental.pallas import tpu as pltpu

# ----------------------------- config (matches nrpa config) ------------------
ID_EMBEDDING_DIM = 16   # ID
ATTEN_VEC_DIM = 16      # A
NUM_OF_FILTERS = 8      # F
REVIEWS_SIZE = 4        # R
BATCH = 2               # B
ID_MATRIX_LEN = 10      # id embedding rows

F32 = jnp.float32


# ------------------------------- fused kernel --------------------------------
def ui_encoder_kernel(ids_ref, rev_ref, emb_ref, w1t_ref, b1_ref, a2_ref,
                      out_ref):
    # ids_ref : SMEM (B,) int32            scalar-prefetched id indices
    # rev_ref : (B, F, R)  review_matrix   (same layout as the torch module)
    # emb_ref : (id_len, 1, ID)            id embedding table
    # w1t_ref : (ID, A)    l1 weight (transposed);  b1_ref : (1, A)
    # a2_ref  : (A, F)
    # out_ref : (B, F)     q  (reshaped to (B, 1, F) in the wrapper)
    B, Fn, R = rev_ref.shape

    # --- id embedding gather: dynamic leading-dim index with SMEM scalars ----
    rows = [emb_ref[ids_ref[b]] for b in range(B)]       # each (1, ID)
    idm = jnp.concatenate(rows, axis=0)                  # (B, ID)

    # --- attention query (computed once for the whole batch) -----------------
    qr = jnp.maximum(
        jnp.dot(idm, w1t_ref[...], preferred_element_type=F32) + b1_ref[...],
        0.0)                                             # (B, A)
    e = jnp.dot(qr, a2_ref[...], preferred_element_type=F32)    # (B, F)

    # --- attention over reviews: VPU mul + XLU reduce (too small for MXU) ----
    rev = rev_ref[...]                                   # (B, F, R)
    scores = jnp.sum(e[:, :, None] * rev, axis=1)        # (B, R)
    scores = scores - jnp.max(scores, axis=1, keepdims=True)
    p = jnp.exp(scores)
    beta = p / jnp.sum(p, axis=1, keepdims=True)         # (B, R)  softmax

    # --- weighted sum over reviews: q[b,f] = sum_r rev[b,f,r] * beta[b,r] ----
    q = jnp.sum(rev * beta[:, None, :], axis=2)          # (B, F)
    out_ref[...] = q


# ------------------------------- wrapper --------------------------------------
def ui_encoder_forward(review_matrix, id_num, params):
    """Pallas equivalent of UIEncoder.forward(review_matrix, id_num)."""
    id_emb, w1t, b1, A2 = (params["id_emb"], params["l1_w_t"],
                           params["l1_b"], params["A2"])
    B, Fn, R = review_matrix.shape
    id_len, ID = id_emb.shape
    A = w1t.shape[1]

    ids = id_num.reshape(-1).astype(jnp.int32)           # (B,)
    emb3 = id_emb.reshape(id_len, 1, ID)                 # leading-dim gather

    q = pl.pallas_call(
        ui_encoder_kernel,
        out_shape=jax.ShapeDtypeStruct((B, Fn), F32),
        grid_spec=pltpu.PrefetchScalarGridSpec(
            num_scalar_prefetch=1,
            grid=(1,),   # single step: everything resident, no per-step cost
            in_specs=[
                pl.BlockSpec((B, Fn, R), lambda i, ids: (0, 0, 0)),
                pl.BlockSpec((id_len, 1, ID), lambda i, ids: (0, 0, 0)),
                pl.BlockSpec((ID, A), lambda i, ids: (0, 0)),
                pl.BlockSpec((1, A), lambda i, ids: (0, 0)),
                pl.BlockSpec((A, Fn), lambda i, ids: (0, 0)),
            ],
            out_specs=pl.BlockSpec((B, Fn), lambda i, ids: (0, 0)),
        ),
        compiler_params=pltpu.CompilerParams(
            dimension_semantics=("arbitrary",)),
    )(ids, review_matrix.astype(F32), emb3, w1t, b1, A2)

    return q.reshape(B, 1, Fn)                           # torch output (B,1,F)


# ----------------------------- pure-JAX reference -----------------------------
def ui_encoder_ref(review_matrix, id_num, params):
    idv = jnp.take(params["id_emb"], id_num.reshape(-1), axis=0)   # (B, ID)
    qr = jax.nn.relu(idv @ params["l1_w_t"] + params["l1_b"])      # (B, A)
    e = qr @ params["A2"]                                          # (B, F)
    scores = jnp.einsum("bf,bfr->br", e, review_matrix)            # (B, R)
    beta = jax.nn.softmax(scores, axis=-1)                         # (B, R)
    q = jnp.einsum("bfr,br->bf", review_matrix, beta)              # (B, F)
    return q[:, None, :]                                           # (B, 1, F)


# --------------------------------- main ---------------------------------------
if __name__ == "__main__":
    key = jax.random.PRNGKey(0)
    k_rev, k_id, k_emb, k_w1, k_b1, k_a2 = jax.random.split(key, 6)

    review_matrix = jax.random.normal(
        k_rev, (BATCH, NUM_OF_FILTERS, REVIEWS_SIZE), dtype=F32)
    id_num = jax.random.randint(
        k_id, (BATCH, 1), 0, ID_MATRIX_LEN, dtype=jnp.int32)

    params = dict(
        id_emb=0.1 * jax.random.normal(
            k_emb, (ID_MATRIX_LEN, ID_EMBEDDING_DIM), dtype=F32),
        l1_w_t=0.1 * jax.random.normal(
            k_w1, (ID_EMBEDDING_DIM, ATTEN_VEC_DIM), dtype=F32),
        l1_b=0.1 * jax.random.normal(k_b1, (1, ATTEN_VEC_DIM), dtype=F32),
        A2=jax.random.normal(
            k_a2, (ATTEN_VEC_DIM, NUM_OF_FILTERS), dtype=F32),
    )

    q = ui_encoder_forward(review_matrix, id_num, params)
    q = jax.block_until_ready(q)

    q_ref = ui_encoder_ref(review_matrix, id_num, params)
    assert q.shape == (BATCH, 1, NUM_OF_FILTERS)
    assert bool(jnp.all(jnp.isfinite(q)))
    assert bool(jnp.allclose(q, q_ref, atol=1e-5, rtol=1e-5)), (
        float(jnp.max(jnp.abs(q - q_ref))))
    print("KERNEL_OK")
</pallas_src>

<mosaic_0001>
module attributes {stable_mosaic.version = 11 : i64} {
  func.func @ui_encoder_kernel(%arg0: i32, %arg1: memref<2xi32, #tpu.memory_space<smem>>, %arg2: memref<2x8x4xf32, #tpu.memory_space<vmem>>, %arg3: memref<10x1x16xf32, #tpu.memory_space<vmem>>, %arg4: memref<16x16xf32, #tpu.memory_space<vmem>>, %arg5: memref<1x16xf32, #tpu.memory_space<vmem>>, %arg6: memref<16x8xf32, #tpu.memory_space<vmem>>, %arg7: memref<2x8xf32, #tpu.memory_space<vmem>>) attributes {dimension_semantics = [#tpu.dimension_semantics<arbitrary>], iteration_bounds = array<i64: 1>, scalar_prefetch = 1 : i64, scratch_operands = 0 : i64, tpu.core_type = #tpu.core_type<tc>, window_params = [{pipeline_mode = #tpu.pipeline_mode<synchronous>, transform_indices = @transform_0, window_bounds = array<i64: 2, 8, 4>}, {pipeline_mode = #tpu.pipeline_mode<synchronous>, transform_indices = @transform_1, window_bounds = array<i64: 10, 1, 16>}, {pipeline_mode = #tpu.pipeline_mode<synchronous>, transform_indices = @transform_2, window_bounds = array<i64: 16, 16>}, {pipeline_mode = #tpu.pipeline_mode<synchronous>, transform_indices = @transform_3, window_bounds = array<i64: 1, 16>}, {pipeline_mode = #tpu.pipeline_mode<synchronous>, transform_indices = @transform_4, window_bounds = array<i64: 16, 8>}, {pipeline_mode = #tpu.pipeline_mode<synchronous>, transform_indices = @transform_5, window_bounds = array<i64: 2, 8>}]} {
    %c0 = arith.constant 0 : index
    %0 = memref.load %arg1[%c0] : memref<2xi32, #tpu.memory_space<smem>>
    %1 = arith.index_cast %0 : i32 to index
    %c0_0 = arith.constant 0 : index
    %c0_1 = arith.constant 0 : index
    %2 = vector.load %arg3[%1, %c0_0, %c0_1] : memref<10x1x16xf32, #tpu.memory_space<vmem>>, vector<1x1x16xf32>
    %3 = vector.shape_cast %2 : vector<1x1x16xf32> to vector<1x16xf32>
    %c1 = arith.constant 1 : index
    %4 = memref.load %arg1[%c1] : memref<2xi32, #tpu.memory_space<smem>>
    %5 = arith.index_cast %4 : i32 to index
    %c0_2 = arith.constant 0 : index
    %c0_3 = arith.constant 0 : index
    %6 = vector.load %arg3[%5, %c0_2, %c0_3] : memref<10x1x16xf32, #tpu.memory_space<vmem>>, vector<1x1x16xf32>
    %7 = vector.shape_cast %6 : vector<1x1x16xf32> to vector<1x16xf32>
    %8 = tpu.concatenate %3, %7 in 0 : vector<1x16xf32>, vector<1x16xf32> -> vector<2x16xf32>
    %c0_4 = arith.constant 0 : index
    %c0_5 = arith.constant 0 : index
    %9 = vector.load %arg4[%c0_4, %c0_5] : memref<16x16xf32, #tpu.memory_space<vmem>>, vector<16x16xf32>
    %cst = arith.constant dense<0.000000e+00> : vector<2x16xf32>
    %10 = tpu.matmul %8, %9, %cst {dimension_numbers = #tpu.dot_dimension_numbers<[1], [0], [0], [1], [0, 0, 1, 1], [], []>} : vector<2x16xf32>, vector<16x16xf32>, vector<2x16xf32> -> vector<2x16xf32>
    %c0_6 = arith.constant 0 : index
    %c0_7 = arith.constant 0 : index
    %11 = vector.load %arg5[%c0_6, %c0_7] : memref<1x16xf32, #tpu.memory_space<vmem>>, vector<1x16xf32>
    %12 = vector.broadcast %11 : vector<1x16xf32> to vector<2x16xf32>
    %13 = arith.addf %10, %12 : vector<2x16xf32>
    %cst_8 = arith.constant 0.000000e+00 : f32
    %14 = vector.broadcast %cst_8 : f32 to vector<2x16xf32>
    %15 = arith.maximumf %13, %14 : vector<2x16xf32>
    %c0_9 = arith.constant 0 : index
    %c0_10 = arith.constant 0 : index
    %16 = vector.load %arg6[%c0_9, %c0_10] : memref<16x8xf32, #tpu.memory_space<vmem>>, vector<16x8xf32>
    %cst_11 = arith.constant dense<0.000000e+00> : vector<2x8xf32>
    %17 = tpu.matmul %15, %16, %cst_11 {dimension_numbers = #tpu.dot_dimension_numbers<[1], [0], [0], [1], [0, 0, 1, 1], [], []>} : vector<2x16xf32>, vector<16x8xf32>, vector<2x8xf32> -> vector<2x8xf32>
    %c0_12 = arith.constant 0 : index
    %c0_13 = arith.constant 0 : index
    %c0_14 = arith.constant 0 : index
    %18 = vector.load %arg2[%c0_12, %c0_13, %c0_14] : memref<2x8x4xf32, #tpu.memory_space<vmem>>, vector<2x8x4xf32>
    %19 = vector.shape_cast %17 : vector<2x8xf32> to vector<2x8x1xf32>
    %20 = vector.broadcast %19 : vector<2x8x1xf32> to vector<2x8x4xf32>
    %21 = arith.mulf %20, %18 : vector<2x8x4xf32>
    %cst_15 = arith.constant dense<0.000000e+00> : vector<2x4xf32>
    %22 = vector.multi_reduction <add>, %21, %cst_15 [1] : vector<2x8x4xf32> to vector<2x4xf32>
    %cst_16 = arith.constant dense<0xFF800000> : vector<2xf32>
    %23 = vector.multi_reduction <maximumf>, %22, %cst_16 [1] : vector<2x4xf32> to vector<2xf32>
    %24 = vector.shape_cast %23 : vector<2xf32> to vector<2x1xf32>
    %25 = vector.broadcast %24 : vector<2x1xf32> to vector<2x4xf32>
    %26 = arith.subf %22, %25 : vector<2x4xf32>
    %27 = math.exp %26 : vector<2x4xf32>
    %cst_17 = arith.constant dense<0.000000e+00> : vector<2xf32>
    %28 = vector.multi_reduction <add>, %27, %cst_17 [1] : vector<2x4xf32> to vector<2xf32>
    %29 = vector.shape_cast %28 : vector<2xf32> to vector<2x1xf32>
    %30 = vector.broadcast %29 : vector<2x1xf32> to vector<2x4xf32>
    %31 = arith.divf %27, %30 : vector<2x4xf32>
    %32 = vector.shape_cast %31 : vector<2x4xf32> to vector<2x1x4xf32>
    %33 = vector.broadcast %32 : vector<2x1x4xf32> to vector<2x8x4xf32>
    %34 = arith.mulf %18, %33 : vector<2x8x4xf32>
    %cst_18 = arith.constant dense<0.000000e+00> : vector<2x8xf32>
    %35 = vector.multi_reduction <add>, %34, %cst_18 [2] : vector<2x8x4xf32> to vector<2x8xf32>
    %c0_19 = arith.constant 0 : index
    %c0_20 = arith.constant 0 : index
    %36 = vector.load %arg7[%c0_19, %c0_20] : memref<2x8xf32, #tpu.memory_space<vmem>>, vector<2x8xf32>
    tpu.vector_store %arg7[%c0_19, %c0_20], %35 {strides = array<i32>} : memref<2x8xf32, #tpu.memory_space<vmem>>, vector<2x8xf32>,
    return
  }
  func.func @transform_0(%arg0: i32, %arg1: memref<2xi32, #tpu.memory_space<smem>>) -> (i32, i32, i32) {
    %c0_i32 = arith.constant 0 : i32
    %c0_i32_0 = arith.constant 0 : i32
    %c0_i32_1 = arith.constant 0 : i32
    %c0_i32_2 = arith.constant 0 : i32
    return %c0_i32, %c0_i32_0, %c0_i32_1 : i32, i32, i32
  }
  func.func @transform_1(%arg0: i32, %arg1: memref<2xi32, #tpu.memory_space<smem>>) -> (i32, i32, i32) {
    %c0_i32 = arith.constant 0 : i32
    %c0_i32_0 = arith.constant 0 : i32
    %c0_i32_1 = arith.constant 0 : i32
    %c0_i32_2 = arith.constant 0 : i32
    return %c0_i32, %c0_i32_0, %c0_i32_1 : i32, i32, i32
  }
  func.func @transform_2(%arg0: i32, %arg1: memref<2xi32, #tpu.memory_space<smem>>) -> (i32, i32) {
    %c0_i32 = arith.constant 0 : i32
    %c0_i32_0 = arith.constant 0 : i32
    %c0_i32_1 = arith.constant 0 : i32
    return %c0_i32, %c0_i32_0 : i32, i32
  }
  func.func @transform_3(%arg0: i32, %arg1: memref<2xi32, #tpu.memory_space<smem>>) -> (i32, i32) {
    %c0_i32 = arith.constant 0 : i32
    %c0_i32_0 = arith.constant 0 : i32
    %c0_i32_1 = arith.constant 0 : i32
    return %c0_i32, %c0_i32_0 : i32, i32
  }
  func.func @transform_4(%arg0: i32, %arg1: memref<2xi32, #tpu.memory_space<smem>>) -> (i32, i32) {
    %c0_i32 = arith.constant 0 : i32
    %c0_i32_0 = arith.constant 0 : i32
    %c0_i32_1 = arith.constant 0 : i32
    return %c0_i32, %c0_i32_0 : i32, i32
  }
  func.func @transform_5(%arg0: i32, %arg1: memref<2xi32, #tpu.memory_space<smem>>) -> (i32, i32) {
    %c0_i32 = arith.constant 0 : i32
    %c0_i32_0 = arith.constant 0 : i32
    %c0_i32_1 = arith.constant 0 : i32
    return %c0_i32, %c0_i32_0 : i32, i32
  }
}

</mosaic_0001>

<llo_original>
// kernel: tpu_custom_call.1
$region0: #{tpu_custom_call.1}
  #allocation0 [shape = 'u32[]', space=smem, size = 0x4, offset = 0x4, fixed_abs, tag = 'smem constant byte address 0x4 - core index']
  #allocation1 [shape = 'u32[144,128]{1,0:T(1,128)}', space=vmem, size = 0x12000, scoped, tag = 'internal scratch']
  #allocation2 [shape = 's32[1]{0}', space=sflag, size = 0x4, scoped, tag = 'scoped memory for tpu_custom_call.1']
  #allocation3 [shape = 'u8[512]{0}', space=smem, size = 0x200, scoped, tag = 'prefetched SMEM operand 0']
  %s0 = inlined_call_operand.vmem [shape: s32[2], index: 0, kind: input, shape index: {}]
  %s1 = inlined_call_operand.vmem [shape: f32[2,8,4], index: 1, kind: input, shape index: {}]
  %s2 = inlined_call_operand.vmem [shape: f32[10,1,16], index: 2, kind: input, shape index: {}]
  %s3 = inlined_call_operand.vmem [shape: f32[16,16], index: 3, kind: input, shape index: {}]
  %s4 = inlined_call_operand.vmem [shape: f32[1,16], index: 4, kind: input, shape index: {}]
  %s5 = inlined_call_operand.vmem [shape: f32[16,8], index: 5, kind: input, shape index: {}]
  %s6 = inlined_call_operand.hbm [shape: f32[2,8], index: 6, kind: output, shape index: {}]
  %s7 = sld [smem:[#allocation0]]
  $region30: #{tpu_custom_call.1} parent=0
    _
  %s9 = ssub.s32 1, %s7
  %s10 = scalar_select 0, %s9, %s7
  %s11 = sshll.u32 %s0, 4
  %s12 = int_to_ptr.vmem [resolvable:$true] %s11
  %14 = dma.vmem_to_smem %s12, 16, [#allocation3], [#allocation2]
  %15 = dma.done [#allocation2], 16
  %16 = sfence
  $region1: #{tpu_custom_call.1} parent=0
    #allocation4 [shape = 'u8[1024]{0}', space=vmem, size = 0x400, scoped, tag = 'output window, operand 0, single buffered']
    #allocation5 [shape = 's32[1]{0}', space=sflag, size = 0x4, scoped, tag = 'scoped memory for tpu_custom_call.1']
    %17 = vsyncpa [#allocation5], 0
    // Predicated region
    $region2: #{tpu_custom_call.1} parent=1 // pred_check
      _
    $region3: #{tpu_custom_call.1} parent=1 // pred_check_branch
      %19 = sbr.rel (0) target = $region5
    $region4: #{tpu_custom_call.1} parent=1 // pred_region
      _
    $region5: #{tpu_custom_call.1} parent=1 // pred_fallthru
      _
    // Predicated region
    $region6: #{tpu_custom_call.1} parent=1 // pred_check
      _
    $region7: #{tpu_custom_call.1} parent=1 // pred_check_branch
      %21 = sbr.rel (0) target = $region9
    $region8: #{tpu_custom_call.1} parent=1 // pred_region
      _
    $region9: #{tpu_custom_call.1} parent=1 // pred_fallthru
      _
    // Predicated region
    $region10: #{tpu_custom_call.1} parent=1 // pred_check
      _
    $region11: #{tpu_custom_call.1} parent=1 // pred_check_branch
      %23 = sbr.rel (0) target = $region13
    $region12: #{tpu_custom_call.1} parent=1 // pred_region
      _
    $region13: #{tpu_custom_call.1} parent=1 // pred_fallthru
      _
    // Predicated region
    $region14: #{tpu_custom_call.1} parent=1 // pred_check
      _
    $region15: #{tpu_custom_call.1} parent=1 // pred_check_branch
      %25 = sbr.rel (0) target = $region17
    $region16: #{tpu_custom_call.1} parent=1 // pred_region
      _
    $region17: #{tpu_custom_call.1} parent=1 // pred_fallthru
      _
    // Predicated region
    $region18: #{tpu_custom_call.1} parent=1 // pred_check
      _
    $region19: #{tpu_custom_call.1} parent=1 // pred_check_branch
      %27 = sbr.rel (0) target = $region21
    $region20: #{tpu_custom_call.1} parent=1 // pred_region
      _
    $region21: #{tpu_custom_call.1} parent=1 // pred_fallthru
      _
    %s28 = sld [smem:[#allocation3]]
    %s29 = scalar_lea.vmem %s2, %s28
    %v30 = vld [vmem:[%s29] sm:$0x1]
    %s31 = sld [smem:[#allocation3 + $0x1]]
    %s32 = scalar_lea.vmem %s2, %s31
    %v33 = vld [vmem:[%s32] sm:$0x1]
    %v35 = vlaneseq
    %v36 = vshrl.u32 %v35, 7
    %v37 = vsub.s32 0, %v36
    %v38 = vrot.slane %v33, %v37
    %vm40 = vcmask 1040384
    %v41 = vsel %vm40, %v30, %v38
    %v42 = vld [vmem:[%s3] sm:$0xff]
    %v43 = vld [vmem:[%s3 + $0x8] sm:$0xff]
    %v44 = vld [vmem:[%s4] sm:$0x1]
    %v46 = vlaneseq
    %v47 = vshrl.u32 %v46, 7
    %v48 = vsub.s32 0, %v47
    %v49 = vrot.slane %v44, %v48
    %vm51 = vcmask 130048
    %v53 = vsel %vm51, %v41, 0
    %55 = vmatprep.subr.mxu0 0.0
    %56 = vmatpush1.msra.mxu0 %v42
    %57 = vmatprep.subr.mxu0 0.0
    %58 = vmatpush1.msra.mxu0 %v43
    %59 = vmatprep.subr.mxu0 0.0
    %60 = vmatpush1.msra.mxu0 0.0
    %61 = vmatprep.subr.mxu0 0.0
    %62 = vmatpush1.msra.mxu0 0.0
    %63 = vmatprep.subr.mxu0 0.0
    %64 = vmatpush1.msra.mxu0 0.0
    %65 = vmatprep.subr.mxu0 0.0
    %66 = vmatpush1.msra.mxu0 0.0
    %67 = vmatprep.subr.mxu0 0.0
    %68 = vmatpush1.msra.mxu0 0.0
    %69 = vmatprep.subr.mxu0 0.0
    %70 = vmatpush1.msra.mxu0 0.0
    %71 = vmatprep.subr.mxu0 0.0
    %72 = vmatpush1.msra.mxu0 0.0
    %73 = vmatprep.subr.mxu0 0.0
    %74 = vmatpush1.msra.mxu0 0.0
    %75 = vmatprep.subr.mxu0 0.0
    %76 = vmatpush1.msra.mxu0 0.0
    %77 = vmatprep.subr.mxu0 0.0
    %78 = vmatpush1.msra.mxu0 0.0
    %79 = vmatprep.subr.mxu0 0.0
    %80 = vmatpush1.msra.mxu0 0.0
    %81 = vmatprep.subr.mxu0 0.0
    %82 = vmatpush1.msra.mxu0 0.0
    %83 = vmatprep.subr.mxu0 0.0
    %84 = vmatpush1.msra.mxu0 0.0
    %85 = vmatprep.subr.mxu0 0.0
    %86 = vmatpush1.msra.mxu0 0.0
    %87 = vmatprep.subr.mxu0 0.0
    %88 = vmatpush1.msra.mxu0 0.0
    %89 = vmatprep.subr.mxu0 0.0
    %90 = vmatpush1.msra.mxu0 0.0
    %91 = vmatprep.subr.mxu0 0.0
    %92 = vmatpush1.msra.mxu0 0.0
    %93 = vmatprep.subr.mxu0 0.0
    %94 = vmatpush1.msra.mxu0 0.0
    %95 = vmatprep.subr.mxu0 0.0
    %96 = vmatpush1.msra.mxu0 0.0
    %97 = vmatprep.subr.mxu0 0.0
    %98 = vmatpush1.msra.mxu0 0.0
    %99 = vmatprep.subr.mxu0 0.0
    %100 = vmatpush1.msra.mxu0 0.0
    %101 = vmatprep.subr.mxu0 0.0
    %102 = vmatpush1.msra.mxu0 0.0
    %103 = vmatprep.subr.mxu0 0.0
    %104 = vmatpush1.msra.mxu0 0.0
    %105 = vmatprep.subr.mxu0 0.0
    %106 = vmatpush1.msra.mxu0 0.0
    %107 = vmatprep.subr.mxu0 0.0
    %108 = vmatpush1.msra.mxu0 0.0
    %109 = vmatprep.subr.mxu0 0.0
    %110 = vmatpush1.msra.mxu0 0.0
    %111 = vmatprep.subr.mxu0 0.0
    %112 = vmatpush1.msra.mxu0 0.0
    %113 = vmatprep.subr.mxu0 0.0
    %114 = vmatpush1.msra.mxu0 0.0
    %115 = vmatprep.subr.mxu0 0.0
    %116 = vmatpush1.msra.mxu0 0.0
    %117 = vmatprep.subr.mxu0 0.0
    %118 = vmatpush1.msra.mxu0 0.0
    %119 = vmatprep.mubr.f32.mxu0 0.0
    %120 = vmatmul.mubr.f32.gmra.mrb[0].mxu0 %v53
    %v121 = vpop.f32.mrb[0].mxu0
    %v122 = vadd.f32 %v49, %v121
    %v123 = vpop.f32.mrb[0].mxu0
    %124 = vdwg.mxu0
    %v125 = vmax.f32 %v122, 0.0
    %v126 = vld [vmem:[%s5] sm:$0xff]
    %v127 = vld [vmem:[%s5 + $0x8] sm:$0xff]
    %v129 = vsel %vm51, %v125, 0
    %131 = vmatprep.subr.mxu0 0.0
    %132 = vmatpush1.msra.mxu0 %v126
    %133 = vmatprep.subr.mxu0 0.0
    %134 = vmatpush1.msra.mxu0 %v127
    %135 = vmatprep.subr.mxu0 0.0
    %136 = vmatpush1.msra.mxu0 0.0
    %137 = vmatprep.subr.mxu0 0.0
    %138 = vmatpush1.msra.mxu0 0.0
    %139 = vmatprep.subr.mxu0 0.0
    %140 = vmatpush1.msra.mxu0 0.0
    %141 = vmatprep.subr.mxu0 0.0
    %142 = vmatpush1.msra.mxu0 0.0
    %143 = vmatprep.subr.mxu0 0.0
    %144 = vmatpush1.msra.mxu0 0.0
    %145 = vmatprep.subr.mxu0 0.0
    %146 = vmatpush1.msra.mxu0 0.0
    %147 = vmatprep.subr.mxu0 0.0
    %148 = vmatpush1.msra.mxu0 0.0
    %149 = vmatprep.subr.mxu0 0.0
    %150 = vmatpush1.msra.mxu0 0.0
    %151 = vmatprep.subr.mxu0 0.0
    %152 = vmatpush1.msra.mxu0 0.0
    %153 = vmatprep.subr.mxu0 0.0
    %154 = vmatpush1.msra.mxu0 0.0
    %155 = vmatprep.subr.mxu0 0.0
    %156 = vmatpush1.msra.mxu0 0.0
    %157 = vmatprep.subr.mxu0 0.0
    %158 = vmatpush1.msra.mxu0 0.0
    %159 = vmatprep.subr.mxu0 0.0
    %160 = vmatpush1.msra.mxu0 0.0
    %161 = vmatprep.subr.mxu0 0.0
    %162 = vmatpush1.msra.mxu0 0.0
    %163 = vmatprep.subr.mxu0 0.0
    %164 = vmatpush1.msra.mxu0 0.0
    %165 = vmatprep.subr.mxu0 0.0
    %166 = vmatpush1.msra.mxu0 0.0
    %167 = vmatprep.subr.mxu0 0.0
    %168 = vmatpush1.msra.mxu0 0.0
    %169 = vmatprep.subr.mxu0 0.0
    %170 = vmatpush1.msra.mxu0 0.0
    %171 = vmatprep.subr.mxu0 0.0
    %172 = vmatpush1.msra.mxu0 0.0
    %173 = vmatprep.subr.mxu0 0.0
    %174 = vmatpush1.msra.mxu0 0.0
    %175 = vmatprep.subr.mxu0 0.0
    %176 = vmatpush1.msra.mxu0 0.0
    %177 = vmatprep.subr.mxu0 0.0
    %178 = vmatpush1.msra.mxu0 0.0
    %179 = vmatprep.subr.mxu0 0.0
    %180 = vmatpush1.msra.mxu0 0.0
    %181 = vmatprep.subr.mxu0 0.0
    %182 = vmatpush1.msra.mxu0 0.0
    %183 = vmatprep.subr.mxu0 0.0
    %184 = vmatpush1.msra.mxu0 0.0
    %185 = vmatprep.subr.mxu0 0.0
    %186 = vmatpush1.msra.mxu0 0.0
    %187 = vmatprep.subr.mxu0 0.0
    %188 = vmatpush1.msra.mxu0 0.0
    %189 = vmatprep.subr.mxu0 0.0
    %190 = vmatpush1.msra.mxu0 0.0
    %191 = vmatprep.subr.mxu0 0.0
    %192 = vmatpush1.msra.mxu0 0.0
    %193 = vmatprep.subr.mxu0 0.0
    %194 = vmatpush1.msra.mxu0 0.0
    %195 = vmatprep.mubr.f32.mxu0 0.0
    %196 = vmatmul.mubr.f32.gmra.mrb[0].mxu0 %v129
    %v197 = vpop.f32.mrb[0].mxu0
    %v198 = vadd.f32 0.0, %v197
    %v199 = vpop.f32.mrb[0].mxu0
    %200 = vdwg.mxu0
    %v201 = vld [vmem:[%s1] sm:$0xff]
    %v202 = vld [vmem:[%s1 + $0x8] sm:$0xff]
    %v203 = vlaneseq
    %v204 = vshrl.u32 %v203, 7
    %v205 = vsub.s32 0, %v204
    %v206 = vrot.slane %v198, %v205
    %208 = vbcast.lane.b32.xlu0 %v206, 256
    %v209 = vpop.permute.xlu0 %208
    %v210 = vlaneseq
    %v211 = vshrl.u32 %v210, 7
    %v212 = vsub.s32 1, %v211
    %v213 = vrot.slane %v198, %v212
    %215 = vbcast.lane.b32.xlu0 %v213, 256
    %v216 = vpop.permute.xlu0 %215
    %v217 = vmul.f32 %v209, %v201
    %v218 = vmul.f32 %v216, %v202
    %vm219 = vcmask 31744
    %v220 = vsel %vm219, %v217, 0.0
    %v221 = vrot.slane %v220, 4
    %v222 = vadd.f32 %v220, %v221
    %v223 = vrot.slane %v222, 2
    %v224 = vadd.f32 %v222, %v223
    %v225 = vrot.slane %v224, 1
    %v226 = vadd.f32 %v224, %v225
    %v227 = vsel %vm219, %v218, 0.0
    %v228 = vrot.slane %v227, 4
    %v229 = vadd.f32 %v227, %v228
    %v230 = vrot.slane %v229, 2
    %v231 = vadd.f32 %v229, %v230
    %v232 = vrot.slane %v231, 1
    %v233 = vadd.f32 %v231, %v232
    %vm236 = vcmask 1041409
    %v237 = vsel %vm236, %v233, %v226
    %vm239 = vcmask 25600
    %v240 = vsel %vm239, %v237, -inf
    %241 = vmax.xlane.f32.xlu0 %v240
    %v242 = vpop.xlane.xlu0 %241
    %v244 = vrot.slane %v242, 1
    %v247 = vsub.f32 %v226, %v242
    %v248 = vsub.f32 %v233, %v244
    %v249 = vmul.f32 %v247, 1.442695
    %v250 = vpow.pop %v249
    %v251 = vmul.f32 %v248, 1.442695
    %v252 = vpow.pop %v251
    %v255 = vrot.slane %v252, 7
    %v256 = vsel %vm236, %v255, %v250
    %v258 = vsel %vm239, %v256, 0.0
    %259 = vadd.xlane.f32.xlu0 %v258
    %v260 = vpop.xlane.xlu0 %259
    %v262 = vrot.slane %v260, 1
    %v265 = vrcp.pop %v260
    %v266 = vmul.f32 %v250, %v265
    %v267 = vrcp.pop %v262
    %v268 = vmul.f32 %v252, %v267
    %v269 = vlaneseq
    %v270 = vshrl.u32 %v269, 7
    %v271 = vsub.s32 0, %v270
    %v272 = vrot.slane %v266, %v271
    %v273 = vlaneseq
    %v274 = vshrl.u32 %v273, 7
    %v275 = vsub.s32 0, %v274
    %v276 = vrot.slane %v268, %v275
    %v277 = vmul.f32 %v201, %v272
    %v278 = vmul.f32 %v202, %v276
    %v279 = vsel %vm219, %v277, 0.0
    %280 = vadd.xlane.f32.xlu0 %v279
    %v281 = vpop.xlane.xlu0 %280
    %v282 = vsel %vm219, %v278, 0.0
    %283 = vadd.xlane.f32.xlu0 %v282
    %v284 = vpop.xlane.xlu0 %283
    %v287 = vlaneseq
    %v288 = vand.u32 %v287, 127
    %v289 = vlaneseq
    %v290 = vshrl.u32 %v289, 7
    %v291 = vsub.s32 %v288, %v290
    %v292 = vrot.slane %v281, %v291
    %v293 = vlaneseq
    %v294 = vshrl.u32 %v293, 7
    %v295 = vsub.s32 %v288, %v294
    %v296 = vrot.slane %v284, %v295
    %v297 = vsel %vm236, %v296, %v292
    %vm299 = vcmask 58368
    %300 = vst.msk [vmem:[#allocation4] sm:$0x3] %vm299, %v297
    // Predicated region
    $region22: #{tpu_custom_call.1} parent=1 // pred_check
      _
    $region23: #{tpu_custom_call.1} parent=1 // pred_check_branch
      %302 = sbr.rel (0) target = $region25
    $region24: #{tpu_custom_call.1} parent=1 // pred_region
      %s304 = ssub.s32 32, 32
      %305 = vsyncadd [#allocation5], %s304
      %s307 = sshll.u32 [#allocation4], 4
      %s308 = int_to_ptr.vmem [resolvable:$true] %s307
      %310 = dma.vmem_to_hbm [thread:$0]  %s308, 32, %s6, [#allocation5]
    $region25: #{tpu_custom_call.1} parent=1 // pred_fallthru
      _
    // Predicated region
    $region26: #{tpu_custom_call.1} parent=1 // pred_check
      _
    $region27: #{tpu_custom_call.1} parent=1 // pred_check_branch
      %312 = sbr.rel (0) target = $region29
    $region28: #{tpu_custom_call.1} parent=1 // pred_region
      %313 = dma.done [#allocation5], 32
    $region29: #{tpu_custom_call.1} parent=1 // pred_fallthru
      _
    %314 = vsyncpa [#allocation5], 1

</llo_original>
